<compile_context>
chip_gen: v6e
topology: v6e:2x2x1
jax: 0.10.0
libtpu: 0.0.40
codegen_flags: <defaults>
</compile_context>

<pallas_src>
import functools

import jax
import jax.numpy as jnp
from jax.experimental import pallas as pl
from jax.experimental.pallas import tpu as pltpu

LANE = 128


def _round_up(n, m):
    return ((n + m - 1) // m) * m


def _fused_mlp_kernel(x_ref, w0_ref, wrest_ref, b_ref, o_ref, *, num_layers):
    """Whole forward pass; intermediate activations never leave VMEM/vregs."""
    h = x_ref[...]                                          # (B, K0) f32
    for i in range(num_layers):                             # statically unrolled
        w = w0_ref[...] if i == 0 else wrest_ref[i - 1]     # bf16 (K0,W)/(W,W), static slice
        b = b_ref[i]                                        # (1, W) f32, static slice
        # MXU bf16 matmul with f32 accumulation; bias add / ReLU on VPU in f32.
        h = jnp.dot(h.astype(w.dtype), w, preferred_element_type=jnp.float32) + b
        if i < num_layers - 1:                              # ReLU between hidden layers
            h = jnp.maximum(h, 0.0)
    o_ref[...] = h.astype(o_ref.dtype)                      # lane-dense (B, W) store


def init_mlp_params(key, input_size, hidden_sizes, output_size):
    """Deterministic init mimicking nn.Linear default (U[-1/sqrt(fan_in), +])."""
    sizes = [input_size] + list(hidden_sizes) + [output_size]
    params = []
    for i in range(1, len(sizes)):
        fan_in, fan_out = sizes[i - 1], sizes[i]
        key, kw, kb = jax.random.split(key, 3)
        bound = 1.0 / jnp.sqrt(jnp.float32(fan_in))
        # Stored as (in, out) = transpose of PyTorch's (out, in) weight.
        w = jax.random.uniform(kw, (fan_in, fan_out), jnp.float32, -bound, bound)
        b = jax.random.uniform(kb, (fan_out,), jnp.float32, -bound, bound)
        params.append((w, b))
    return params


def pack_params_for_kernel(params):
    """One-time pre-shaping (hoisted out of the hot path).

    Zero-pads every layer's in/out dim (except the raw input-feature dim) to a
    single common width W (multiple of 128), casts weights to bf16, and packs:
      w0      (K0, W)       bf16
      w_rest  (L-1, W, W)   bf16
      b_all   (L, 1, W)     f32
    """
    num_layers = len(params)
    assert num_layers >= 2, "packing layout assumes at least one hidden layer"
    k0 = params[0][0].shape[0]
    width = max(_round_up(w.shape[1], LANE) for w, _ in params)

    w0, _ = params[0]
    w0_p = jnp.zeros((k0, width), jnp.float32).at[:, : w0.shape[1]].set(w0)
    w0_p = w0_p.astype(jnp.bfloat16)

    w_rest = []
    for w, _ in params[1:]:
        k, n = w.shape
        wp = jnp.zeros((width, width), jnp.float32).at[:k, :n].set(w)
        w_rest.append(wp.astype(jnp.bfloat16))
    w_rest = jnp.stack(w_rest)

    b_all = []
    for _, b in params:
        bp = jnp.zeros((1, width), jnp.float32).at[0, : b.shape[0]].set(b)
        b_all.append(bp)
    b_all = jnp.stack(b_all)

    logical_dims = [k0] + [w.shape[1] for w, _ in params]
    return dict(w0=w0_p, w_rest=w_rest, b_all=b_all,
                logical_dims=logical_dims, width=width)


def mlp_forward(x, packed):
    """Whole MLP forward as a single fused Pallas kernel.

    Returns the lane-dense padded (B, W) output; columns >= output_size are
    exactly zero -- slice (or fuse) downstream, not here.
    """
    B, K0 = x.shape
    w0, w_rest, b_all = packed["w0"], packed["w_rest"], packed["b_all"]
    width = packed["width"]
    num_layers = b_all.shape[0]

    # Honest advisory cost: flops from UNPADDED logical shapes; bytes = moved bytes.
    dims = packed["logical_dims"]
    flops = sum(2 * B * dims[i] * dims[i + 1] for i in range(num_layers))
    bytes_accessed = (x.size * x.dtype.itemsize
                      + w0.size * w0.dtype.itemsize
                      + w_rest.size * w_rest.dtype.itemsize
                      + b_all.size * b_all.dtype.itemsize
                      + B * width * 4)

    vmem = pltpu.MemorySpace.VMEM
    kernel = functools.partial(_fused_mlp_kernel, num_layers=num_layers)
    return pl.pallas_call(
        kernel,
        out_shape=jax.ShapeDtypeStruct((B, width), jnp.float32),
        in_specs=[
            pl.BlockSpec((B, K0), lambda: (0, 0), memory_space=vmem),
            pl.BlockSpec(w0.shape, lambda: (0, 0), memory_space=vmem),
            pl.BlockSpec(w_rest.shape, lambda: (0, 0, 0), memory_space=vmem),
            pl.BlockSpec(b_all.shape, lambda: (0, 0, 0), memory_space=vmem),
        ],
        out_specs=pl.BlockSpec((B, width), lambda: (0, 0), memory_space=vmem),
        cost_estimate=pl.CostEstimate(
            flops=flops, transcendentals=0, bytes_accessed=bytes_accessed),
    )(x, w0, w_rest, b_all)


if __name__ == "__main__":
    key = jax.random.PRNGKey(0)
    k_x, k_p = jax.random.split(key)

    batch = 8
    input_size = 32          # stands in for the bag-of-words + numeric feature dim
    hidden_sizes = [64, 32]  # the `hidden_size` list argument
    output_size = 5

    x = jax.random.normal(k_x, (batch, input_size), dtype=jnp.float32)
    params = init_mlp_params(k_p, input_size, hidden_sizes, output_size)
    packed = pack_params_for_kernel(params)       # one-time, out of hot path

    y_padded = mlp_forward(x, packed)             # (batch, 128), lane-dense
    jax.block_until_ready(y_padded)
    y = y_padded[:, :output_size]                 # consumer-side slice (check only)

    # Sanity: padding columns are exactly zero.
    assert y_padded.shape == (batch, packed["width"])
    assert bool(jnp.all(y_padded[:, output_size:] == 0.0))

    # Reference 1: same math with bf16 weights / bf16 activation casts (tight tol).
    ref_bf16 = x
    for i, (w, b) in enumerate(params):
        ref_bf16 = jnp.dot(ref_bf16.astype(jnp.bfloat16), w.astype(jnp.bfloat16),
                           preferred_element_type=jnp.float32) + b
        if i < len(params) - 1:
            ref_bf16 = jnp.maximum(ref_bf16, 0.0)
    assert jnp.allclose(y, ref_bf16, atol=1e-4, rtol=1e-4)

    # Reference 2: pure-f32 module semantics (tolerance loosened for bf16 weights).
    ref_f32 = x
    for i, (w, b) in enumerate(params):
        ref_f32 = ref_f32 @ w + b
        if i < len(params) - 1:
            ref_f32 = jnp.maximum(ref_f32, 0.0)
    assert y.shape == (batch, output_size)
    assert jnp.allclose(y, ref_f32, atol=2e-2, rtol=2e-2)

    print("KERNEL_OK")
</pallas_src>

<mosaic_0001>
module attributes {stable_mosaic.version = 11 : i64} {
  func.func @_fused_mlp_kernel(%arg0: memref<8x32xf32, #tpu.memory_space<vmem>>, %arg1: memref<32x128xbf16, #tpu.memory_space<vmem>>, %arg2: memref<2x128x128xbf16, #tpu.memory_space<vmem>>, %arg3: memref<3x1x128xf32, #tpu.memory_space<vmem>>, %arg4: memref<8x128xf32, #tpu.memory_space<vmem>>) attributes {dimension_semantics = [], scalar_prefetch = 0 : i64, scratch_operands = 0 : i64, tpu.core_type = #tpu.core_type<tc>} {
    %c0 = arith.constant 0 : index
    %c0_0 = arith.constant 0 : index
    %0 = vector.load %arg0[%c0, %c0_0] : memref<8x32xf32, #tpu.memory_space<vmem>>, vector<8x32xf32>
    %c0_1 = arith.constant 0 : index
    %c0_2 = arith.constant 0 : index
    %1 = vector.load %arg1[%c0_1, %c0_2] : memref<32x128xbf16, #tpu.memory_space<vmem>>, vector<32x128xbf16>
    %c0_3 = arith.constant 0 : index
    %c0_4 = arith.constant 0 : index
    %c0_5 = arith.constant 0 : index
    %2 = vector.load %arg3[%c0_3, %c0_4, %c0_5] : memref<3x1x128xf32, #tpu.memory_space<vmem>>, vector<1x1x128xf32>
    %3 = vector.shape_cast %2 : vector<1x1x128xf32> to vector<1x128xf32>
    %4 = arith.truncf %0 : vector<8x32xf32> to vector<8x32xbf16>
    %cst = arith.constant dense<0.000000e+00> : vector<8x128xf32>
    %5 = tpu.matmul %4, %1, %cst {dimension_numbers = #tpu.dot_dimension_numbers<[1], [0], [0], [1], [0, 0, 1, 1], [], []>} : vector<8x32xbf16>, vector<32x128xbf16>, vector<8x128xf32> -> vector<8x128xf32>
    %6 = vector.broadcast %3 : vector<1x128xf32> to vector<8x128xf32>
    %7 = arith.addf %5, %6 : vector<8x128xf32>
    %cst_6 = arith.constant 0.000000e+00 : f32
    %8 = vector.broadcast %cst_6 : f32 to vector<8x128xf32>
    %9 = arith.maximumf %7, %8 : vector<8x128xf32>
    %c0_7 = arith.constant 0 : index
    %c0_8 = arith.constant 0 : index
    %c0_9 = arith.constant 0 : index
    %10 = vector.load %arg2[%c0_7, %c0_8, %c0_9] : memref<2x128x128xbf16, #tpu.memory_space<vmem>>, vector<1x128x128xbf16>
    %11 = vector.shape_cast %10 : vector<1x128x128xbf16> to vector<128x128xbf16>
    %c1 = arith.constant 1 : index
    %c0_10 = arith.constant 0 : index
    %c0_11 = arith.constant 0 : index
    %12 = vector.load %arg3[%c1, %c0_10, %c0_11] : memref<3x1x128xf32, #tpu.memory_space<vmem>>, vector<1x1x128xf32>
    %13 = vector.shape_cast %12 : vector<1x1x128xf32> to vector<1x128xf32>
    %14 = arith.truncf %9 : vector<8x128xf32> to vector<8x128xbf16>
    %cst_12 = arith.constant dense<0.000000e+00> : vector<8x128xf32>
    %15 = tpu.matmul %14, %11, %cst_12 {dimension_numbers = #tpu.dot_dimension_numbers<[1], [0], [0], [1], [0, 0, 1, 1], [], []>} : vector<8x128xbf16>, vector<128x128xbf16>, vector<8x128xf32> -> vector<8x128xf32>
    %16 = vector.broadcast %13 : vector<1x128xf32> to vector<8x128xf32>
    %17 = arith.addf %15, %16 : vector<8x128xf32>
    %cst_13 = arith.constant 0.000000e+00 : f32
    %18 = vector.broadcast %cst_13 : f32 to vector<8x128xf32>
    %19 = arith.maximumf %17, %18 : vector<8x128xf32>
    %c1_14 = arith.constant 1 : index
    %c0_15 = arith.constant 0 : index
    %c0_16 = arith.constant 0 : index
    %20 = vector.load %arg2[%c1_14, %c0_15, %c0_16] : memref<2x128x128xbf16, #tpu.memory_space<vmem>>, vector<1x128x128xbf16>
    %21 = vector.shape_cast %20 : vector<1x128x128xbf16> to vector<128x128xbf16>
    %c2 = arith.constant 2 : index
    %c0_17 = arith.constant 0 : index
    %c0_18 = arith.constant 0 : index
    %22 = vector.load %arg3[%c2, %c0_17, %c0_18] : memref<3x1x128xf32, #tpu.memory_space<vmem>>, vector<1x1x128xf32>
    %23 = vector.shape_cast %22 : vector<1x1x128xf32> to vector<1x128xf32>
    %24 = arith.truncf %19 : vector<8x128xf32> to vector<8x128xbf16>
    %cst_19 = arith.constant dense<0.000000e+00> : vector<8x128xf32>
    %25 = tpu.matmul %24, %21, %cst_19 {dimension_numbers = #tpu.dot_dimension_numbers<[1], [0], [0], [1], [0, 0, 1, 1], [], []>} : vector<8x128xbf16>, vector<128x128xbf16>, vector<8x128xf32> -> vector<8x128xf32>
    %26 = vector.broadcast %23 : vector<1x128xf32> to vector<8x128xf32>
    %27 = arith.addf %25, %26 : vector<8x128xf32>
    %c0_20 = arith.constant 0 : index
    %c0_21 = arith.constant 0 : index
    %28 = vector.load %arg4[%c0_20, %c0_21] : memref<8x128xf32, #tpu.memory_space<vmem>>, vector<8x128xf32>
    tpu.vector_store %arg4[%c0_20, %c0_21], %27 {strides = array<i32>} : memref<8x128xf32, #tpu.memory_space<vmem>>, vector<8x128xf32>,
    return
  }
}

</mosaic_0001>

<llo_original>
// kernel: tpu_custom_call.1
$region0: #{tpu_custom_call.1}
  #allocation0 [shape = 'u32[]', space=smem, size = 0x4, offset = 0x4, fixed_abs, tag = 'smem constant byte address 0x4 - core index']
  #allocation1 [shape = 'u32[144,128]{1,0:T(1,128)}', space=vmem, size = 0x12000, scoped, tag = 'internal scratch']
  %s0 = inlined_call_operand.hbm [shape: f32[8,32], index: 0, kind: input, shape index: {}]
  %s1 = inlined_call_operand.hbm [shape: bf16[32,128], index: 1, kind: input, shape index: {}]
  %s2 = inlined_call_operand.hbm [shape: bf16[2,128,128], index: 2, kind: input, shape index: {}]
  %s3 = inlined_call_operand.vmem [shape: f32[3,1,128], index: 3, kind: input, shape index: {}]
  %s4 = inlined_call_operand.hbm [shape: f32[8,128], index: 4, kind: output, shape index: {}]
  %s5 = sld [smem:[#allocation0]]
  $region38: #{tpu_custom_call.1} parent=0
    _
  %s7 = ssub.s32 1, %s5
  %s8 = scalar_select 0, %s7, %s5
  $region1: #{tpu_custom_call.1} parent=0
    #allocation2 [shape = 'u8[4096]{0}', space=vmem, size = 0x1000, scoped, tag = 'input window, operand 0, single buffered']
    #allocation3 [shape = 's32[1]{0}', space=sflag, size = 0x4, scoped, tag = 'scoped memory for tpu_custom_call.1']
    #allocation4 [shape = 's32[1]{0}', space=sflag, size = 0x4, scoped, tag = 'scoped memory for tpu_custom_call.1']
    #allocation5 [shape = 'u8[8192]{0}', space=vmem, size = 0x2000, scoped, tag = 'input window, operand 1, single buffered']
    #allocation6 [shape = 's32[1]{0}', space=sflag, size = 0x4, scoped, tag = 'scoped memory for tpu_custom_call.1']
    #allocation7 [shape = 'u8[65536]{0}', space=vmem, size = 0x10000, scoped, tag = 'input window, operand 2, single buffered']
    #allocation8 [shape = 'u8[4096]{0}', space=vmem, size = 0x1000, scoped, tag = 'output window, operand 0, single buffered']
    %9 = vsyncpa [#allocation3], 0
    %10 = vsyncpa [#allocation6], 0
    %11 = vsyncpa [#allocation4], 0
    // Predicated region
    $region2: #{tpu_custom_call.1} parent=1 // pred_check
      _
    $region3: #{tpu_custom_call.1} parent=1 // pred_check_branch
      %13 = sbr.rel (0) target = $region5
    $region4: #{tpu_custom_call.1} parent=1 // pred_region
      %s15 = ssub.s32 128, 128
      %16 = vsyncadd [#allocation3], %s15
      %s18 = sshll.u32 [#allocation2], 4
      %s19 = int_to_ptr.vmem [resolvable:$true] %s18
      %21 = dma.hbm_to_vmem [thread:$0]  %s0, 128, %s19, [#allocation3]
    $region5: #{tpu_custom_call.1} parent=1 // pred_fallthru
      _
    // Predicated region
    $region6: #{tpu_custom_call.1} parent=1 // pred_check
      _
    $region7: #{tpu_custom_call.1} parent=1 // pred_check_branch
      %23 = sbr.rel (0) target = $region9
    $region8: #{tpu_custom_call.1} parent=1 // pred_region
      %s25 = ssub.s32 256, 256
      %26 = vsyncadd [#allocation6], %s25
      %s27 = sshll.u32 [#allocation5], 4
      %s28 = int_to_ptr.vmem [resolvable:$true] %s27
      %33 = dma.hbm_to_vmem [thread:$0]  %s1, 256, %s28, [#allocation6], 64, 64, 4
    $region9: #{tpu_custom_call.1} parent=1 // pred_fallthru
      _
    // Predicated region
    $region10: #{tpu_custom_call.1} parent=1 // pred_check
      _
    $region11: #{tpu_custom_call.1} parent=1 // pred_check_branch
      %35 = sbr.rel (0) target = $region13
    $region12: #{tpu_custom_call.1} parent=1 // pred_region
      %s37 = ssub.s32 2048, 2048
      %38 = vsyncadd [#allocation6], %s37
      %s39 = sshll.u32 [#allocation7], 4
      %s40 = int_to_ptr.vmem [resolvable:$true] %s39
      %45 = dma.hbm_to_vmem [thread:$0]  %s2, 2048, %s40, [#allocation6], 64, 64, 4
    $region13: #{tpu_custom_call.1} parent=1 // pred_fallthru
      _
    // Predicated region
    $region14: #{tpu_custom_call.1} parent=1 // pred_check
      _
    $region15: #{tpu_custom_call.1} parent=1 // pred_check_branch
      %47 = sbr.rel (0) target = $region17
    $region16: #{tpu_custom_call.1} parent=1 // pred_region
      _
    $region17: #{tpu_custom_call.1} parent=1 // pred_fallthru
      _
    // Predicated region
    $region18: #{tpu_custom_call.1} parent=1 // pred_check
      _
    $region19: #{tpu_custom_call.1} parent=1 // pred_check_branch
      %49 = sbr.rel (0) target = $region21
    $region20: #{tpu_custom_call.1} parent=1 // pred_region
      %50 = dma.done [#allocation3], 128
    $region21: #{tpu_custom_call.1} parent=1 // pred_fallthru
      _
    // Predicated region
    $region22: #{tpu_custom_call.1} parent=1 // pred_check
      _
    $region23: #{tpu_custom_call.1} parent=1 // pred_check_branch
      %52 = sbr.rel (0) target = $region25
    $region24: #{tpu_custom_call.1} parent=1 // pred_region
      %53 = dma.done [#allocation6], 256
    $region25: #{tpu_custom_call.1} parent=1 // pred_fallthru
      _
    // Predicated region
    $region26: #{tpu_custom_call.1} parent=1 // pred_check
      _
    $region27: #{tpu_custom_call.1} parent=1 // pred_check_branch
      %55 = sbr.rel (0) target = $region29
    $region28: #{tpu_custom_call.1} parent=1 // pred_region
      %56 = dma.done [#allocation6], 2048
    $region29: #{tpu_custom_call.1} parent=1 // pred_fallthru
      _
    %v58 = vld [vmem:[#allocation2] sm:$0xff]
    %v59 = vld [vmem:[#allocation5] sm:$0xf]
    %v60 = vld [vmem:[#allocation5 + $0x4] sm:$0xf]
    %v61 = vld [vmem:[#allocation5 + $0x8] sm:$0xf]
    %v62 = vld [vmem:[#allocation5 + $0xc] sm:$0xf]
    %v63 = vld [vmem:[%s3] sm:$0x1]
    %v64 = vpack.c.bf16 %v58, %v58
    %v66 = vlaneseq
    %v67 = vshrl.u32 %v66, 7
    %v68 = vsub.s32 0, %v67
    %v69 = vrot.slane %v63, %v68
    %v75 = vunpack.c.l.b16 %v59
    %v76 = vunpack.c.l.b16 %v60
    %v77 = vunpack.c.l.b16 %v61
    %v78 = vunpack.c.l.b16 %v62
    %v79 = vpack.c.b16 %v76, %v75
    %v80 = vpack.c.b16 %v78, %v77
    %vm83 = vcmask 261120
    %v85 = vsel %vm83, %v64, 0
    %87 = vmatprep.subr.bf16.mxu0 0
    %88 = vmatpush1.bf16.msra.mxu0 0
    %89 = vmatprep.subr.bf16.mxu0 0
    %90 = vmatpush1.bf16.msra.mxu0 0
    %91 = vmatprep.subr.bf16.mxu0 0
    %92 = vmatpush1.bf16.msra.mxu0 0
    %93 = vmatprep.subr.bf16.mxu0 0
    %94 = vmatpush1.bf16.msra.mxu0 0
    %95 = vmatprep.subr.bf16.mxu0 0
    %96 = vmatpush1.bf16.msra.mxu0 0
    %97 = vmatprep.subr.bf16.mxu0 0
    %98 = vmatpush1.bf16.msra.mxu0 0
    %99 = vmatprep.subr.bf16.mxu0 0
    %100 = vmatpush1.bf16.msra.mxu0 %v80
    %101 = vmatprep.subr.bf16.mxu0 0
    %102 = vmatpush1.bf16.msra.mxu0 %v79
    %103 = vmatprep.subr.bf16.mxu0 0
    %104 = vmatpush2.bf16.msra.mxu0 0
    %105 = vmatprep.subr.bf16.mxu0 0
    %106 = vmatpush2.bf16.msra.mxu0 0
    %107 = vmatprep.subr.bf16.mxu0 0
    %108 = vmatpush2.bf16.msra.mxu0 0
    %109 = vmatprep.subr.bf16.mxu0 0
    %110 = vmatpush2.bf16.msra.mxu0 0
    %111 = vmatprep.subr.bf16.mxu0 0
    %112 = vmatpush2.bf16.msra.mxu0 0
    %113 = vmatprep.subr.bf16.mxu0 0
    %114 = vmatpush2.bf16.msra.mxu0 0
    %115 = vmatprep.subr.bf16.mxu0 0
    %116 = vmatpush2.bf16.msra.mxu0 0
    %117 = vmatprep.subr.bf16.mxu0 0
    %118 = vmatpush2.bf16.msra.mxu0 0
    %119 = vmatprep.mubr.bf16.mxu0 0
    %120 = vmatmul.mubr.bf16.gmra.mxu0 %v85
    %v121 = vpop.f32.mrf.mxu0
    %v122 = vadd.f32 %v69, %v121
    %v123 = vpop.f32.mrf.mxu0
    %v124 = vpop.f32.mrf.mxu0
    %v125 = vpop.f32.mrf.mxu0
    %126 = vdwg.mxu0
    %v127 = vmax.f32 %v122, 0.0
    %v128 = vld [vmem:[#allocation7] sm:$0xf]
    %v129 = vld [vmem:[#allocation7 + $0x4] sm:$0xf]
    %v130 = vld [vmem:[#allocation7 + $0x8] sm:$0xf]
    %v131 = vld [vmem:[#allocation7 + $0xc] sm:$0xf]
    %v132 = vld [vmem:[#allocation7 + $0x10] sm:$0xf]
    %v133 = vld [vmem:[#allocation7 + $0x14] sm:$0xf]
    %v134 = vld [vmem:[#allocation7 + $0x18] sm:$0xf]
    %v135 = vld [vmem:[#allocation7 + $0x1c] sm:$0xf]
    %v136 = vld [vmem:[#allocation7 + $0x20] sm:$0xf]
    %v137 = vld [vmem:[#allocation7 + $0x24] sm:$0xf]
    %v138 = vld [vmem:[#allocation7 + $0x28] sm:$0xf]
    %v139 = vld [vmem:[#allocation7 + $0x2c] sm:$0xf]
    %v140 = vld [vmem:[#allocation7 + $0x30] sm:$0xf]
    %v141 = vld [vmem:[#allocation7 + $0x34] sm:$0xf]
    %v142 = vld [vmem:[#allocation7 + $0x38] sm:$0xf]
    %v143 = vld [vmem:[#allocation7 + $0x3c] sm:$0xf]
    %s144 = scalar_lea.vmem %s3, 1
    %v145 = vld [vmem:[%s144] sm:$0x1]
    %v146 = vpack.c.bf16 %v127, %v127
    %v148 = vlaneseq
    %v149 = vshrl.u32 %v148, 7
    %v150 = vsub.s32 0, %v149
    %v151 = vrot.slane %v145, %v150
    %v169 = vunpack.c.l.b16 %v128
    %v170 = vunpack.c.l.b16 %v129
    %v171 = vunpack.c.l.b16 %v130
    %v172 = vunpack.c.l.b16 %v131
    %v173 = vunpack.c.l.b16 %v132
    %v174 = vunpack.c.l.b16 %v133
    %v175 = vunpack.c.l.b16 %v134
    %v176 = vunpack.c.l.b16 %v135
    %v177 = vunpack.c.l.b16 %v136
    %v178 = vunpack.c.l.b16 %v137
    %v179 = vunpack.c.l.b16 %v138
    %v180 = vunpack.c.l.b16 %v139
    %v181 = vunpack.c.l.b16 %v140
    %v182 = vunpack.c.l.b16 %v141
    %v183 = vunpack.c.l.b16 %v142
    %v184 = vunpack.c.l.b16 %v143
    %v185 = vpack.c.b16 %v170, %v169
    %v186 = vpack.c.b16 %v172, %v171
    %v187 = vpack.c.b16 %v174, %v173
    %v188 = vpack.c.b16 %v176, %v175
    %v189 = vpack.c.b16 %v178, %v177
    %v190 = vpack.c.b16 %v180, %v179
    %v191 = vpack.c.b16 %v182, %v181
    %v192 = vpack.c.b16 %v184, %v183
    %201 = vmatprep.subr.bf16.mxu0 0
    %202 = vmatpush1.bf16.msra.mxu0 %v192
    %203 = vmatprep.subr.bf16.mxu0 0
    %204 = vmatpush1.bf16.msra.mxu0 %v191
    %205 = vmatprep.subr.bf16.mxu0 0
    %206 = vmatpush1.bf16.msra.mxu0 %v190
    %207 = vmatprep.subr.bf16.mxu0 0
    %208 = vmatpush1.bf16.msra.mxu0 %v189
    %209 = vmatprep.subr.bf16.mxu0 0
    %210 = vmatpush1.bf16.msra.mxu0 %v188
    %211 = vmatprep.subr.bf16.mxu0 0
    %212 = vmatpush1.bf16.msra.mxu0 %v187
    %213 = vmatprep.subr.bf16.mxu0 0
    %214 = vmatpush1.bf16.msra.mxu0 %v186
    %215 = vmatprep.subr.bf16.mxu0 0
    %216 = vmatpush1.bf16.msra.mxu0 %v185
    %217 = vmatprep.subr.bf16.mxu0 0
    %218 = vmatpush2.bf16.msra.mxu0 0
    %219 = vmatprep.subr.bf16.mxu0 0
    %220 = vmatpush2.bf16.msra.mxu0 0
    %221 = vmatprep.subr.bf16.mxu0 0
    %222 = vmatpush2.bf16.msra.mxu0 0
    %223 = vmatprep.subr.bf16.mxu0 0
    %224 = vmatpush2.bf16.msra.mxu0 0
    %225 = vmatprep.subr.bf16.mxu0 0
    %226 = vmatpush2.bf16.msra.mxu0 0
    %227 = vmatprep.subr.bf16.mxu0 0
    %228 = vmatpush2.bf16.msra.mxu0 0
    %229 = vmatprep.subr.bf16.mxu0 0
    %230 = vmatpush2.bf16.msra.mxu0 0
    %231 = vmatprep.subr.bf16.mxu0 0
    %232 = vmatpush2.bf16.msra.mxu0 0
    %233 = vmatprep.mubr.bf16.mxu0 0
    %234 = vmatmul.mubr.bf16.gmra.mxu0 %v146
    %v235 = vpop.f32.mrf.mxu0
    %v236 = vadd.f32 %v151, %v235
    %v237 = vpop.f32.mrf.mxu0
    %v238 = vpop.f32.mrf.mxu0
    %v239 = vpop.f32.mrf.mxu0
    %240 = vdwg.mxu0
    %v241 = vmax.f32 %v236, 0.0
    %s242 = scalar_lea.vmem [#allocation7], 64
    %v243 = vld [vmem:[%s242] sm:$0xf]
    %v244 = vld [vmem:[%s242 + $0x4] sm:$0xf]
    %v245 = vld [vmem:[%s242 + $0x8] sm:$0xf]
    %v246 = vld [vmem:[%s242 + $0xc] sm:$0xf]
    %v247 = vld [vmem:[%s242 + $0x10] sm:$0xf]
    %v248 = vld [vmem:[%s242 + $0x14] sm:$0xf]
    %v249 = vld [vmem:[%s242 + $0x18] sm:$0xf]
    %v250 = vld [vmem:[%s242 + $0x1c] sm:$0xf]
    %v251 = vld [vmem:[%s242 + $0x20] sm:$0xf]
    %v252 = vld [vmem:[%s242 + $0x24] sm:$0xf]
    %v253 = vld [vmem:[%s242 + $0x28] sm:$0xf]
    %v254 = vld [vmem:[%s242 + $0x2c] sm:$0xf]
    %v255 = vld [vmem:[%s242 + $0x30] sm:$0xf]
    %v256 = vld [vmem:[%s242 + $0x34] sm:$0xf]
    %v257 = vld [vmem:[%s242 + $0x38] sm:$0xf]
    %v258 = vld [vmem:[%s242 + $0x3c] sm:$0xf]
    %s259 = scalar_lea.vmem %s3, 2
    %v260 = vld [vmem:[%s259] sm:$0x1]
    %v261 = vpack.c.bf16 %v241, %v241
    %v263 = vlaneseq
    %v264 = vshrl.u32 %v263, 7
    %v265 = vsub.s32 0, %v264
    %v266 = vrot.slane %v260, %v265
    %v284 = vunpack.c.l.b16 %v243
    %v285 = vunpack.c.l.b16 %v244
    %v286 = vunpack.c.l.b16 %v245
    %v287 = vunpack.c.l.b16 %v246
    %v288 = vunpack.c.l.b16 %v247
    %v289 = vunpack.c.l.b16 %v248
    %v290 = vunpack.c.l.b16 %v249
    %v291 = vunpack.c.l.b16 %v250
    %v292 = vunpack.c.l.b16 %v251
    %v293 = vunpack.c.l.b16 %v252
    %v294 = vunpack.c.l.b16 %v253
    %v295 = vunpack.c.l.b16 %v254
    %v296 = vunpack.c.l.b16 %v255
    %v297 = vunpack.c.l.b16 %v256
    %v298 = vunpack.c.l.b16 %v257
    %v299 = vunpack.c.l.b16 %v258
    %v300 = vpack.c.b16 %v285, %v284
    %v301 = vpack.c.b16 %v287, %v286
    %v302 = vpack.c.b16 %v289, %v288
    %v303 = vpack.c.b16 %v291, %v290
    %v304 = vpack.c.b16 %v293, %v292
    %v305 = vpack.c.b16 %v295, %v294
    %v306 = vpack.c.b16 %v297, %v296
    %v307 = vpack.c.b16 %v299, %v298
    %316 = vmatprep.subr.bf16.mxu0 0
    %317 = vmatpush1.bf16.msra.mxu0 %v307
    %318 = vmatprep.subr.bf16.mxu0 0
    %319 = vmatpush1.bf16.msra.mxu0 %v306
    %320 = vmatprep.subr.bf16.mxu0 0
    %321 = vmatpush1.bf16.msra.mxu0 %v305
    %322 = vmatprep.subr.bf16.mxu0 0
    %323 = vmatpush1.bf16.msra.mxu0 %v304
    %324 = vmatprep.subr.bf16.mxu0 0
    %325 = vmatpush1.bf16.msra.mxu0 %v303
    %326 = vmatprep.subr.bf16.mxu0 0
    %327 = vmatpush1.bf16.msra.mxu0 %v302
    %328 = vmatprep.subr.bf16.mxu0 0
    %329 = vmatpush1.bf16.msra.mxu0 %v301
    %330 = vmatprep.subr.bf16.mxu0 0
    %331 = vmatpush1.bf16.msra.mxu0 %v300
    %332 = vmatprep.subr.bf16.mxu0 0
    %333 = vmatpush2.bf16.msra.mxu0 0
    %334 = vmatprep.subr.bf16.mxu0 0
    %335 = vmatpush2.bf16.msra.mxu0 0
    %336 = vmatprep.subr.bf16.mxu0 0
    %337 = vmatpush2.bf16.msra.mxu0 0
    %338 = vmatprep.subr.bf16.mxu0 0
    %339 = vmatpush2.bf16.msra.mxu0 0
    %340 = vmatprep.subr.bf16.mxu0 0
    %341 = vmatpush2.bf16.msra.mxu0 0
    %342 = vmatprep.subr.bf16.mxu0 0
    %343 = vmatpush2.bf16.msra.mxu0 0
    %344 = vmatprep.subr.bf16.mxu0 0
    %345 = vmatpush2.bf16.msra.mxu0 0
    %346 = vmatprep.subr.bf16.mxu0 0
    %347 = vmatpush2.bf16.msra.mxu0 0
    %348 = vmatprep.mubr.bf16.mxu0 0
    %349 = vmatmul.mubr.bf16.gmra.mxu0 %v261
    %v350 = vpop.f32.mrf.mxu0
    %v351 = vadd.f32 %v266, %v350
    %v352 = vpop.f32.mrf.mxu0
    %v353 = vpop.f32.mrf.mxu0
    %v354 = vpop.f32.mrf.mxu0
    %355 = vdwg.mxu0
    %356 = vst [vmem:[#allocation8] sm:$0xff] %v351
    // Predicated region
    $region30: #{tpu_custom_call.1} parent=1 // pred_check
      _
    $region31: #{tpu_custom_call.1} parent=1 // pred_check_branch
      %358 = sbr.rel (0) target = $region33
    $region32: #{tpu_custom_call.1} parent=1 // pred_region
      %s360 = ssub.s32 128, 128
      %361 = vsyncadd [#allocation4], %s360
      %s363 = sshll.u32 [#allocation8], 4
      %s364 = int_to_ptr.vmem [resolvable:$true] %s363
      %366 = dma.vmem_to_hbm [thread:$0]  %s364, 128, %s4, [#allocation4]
    $region33: #{tpu_custom_call.1} parent=1 // pred_fallthru
      _
    // Predicated region
    $region34: #{tpu_custom_call.1} parent=1 // pred_check
      _
    $region35: #{tpu_custom_call.1} parent=1 // pred_check_branch
      %368 = sbr.rel (0) target = $region37
    $region36: #{tpu_custom_call.1} parent=1 // pred_region
      %369 = dma.done [#allocation4], 128
    $region37: #{tpu_custom_call.1} parent=1 // pred_fallthru
      _
    %370 = vsyncpa [#allocation3], 1
    %371 = vsyncpa [#allocation6], 1
    %372 = vsyncpa [#allocation4], 1

</llo_original>
